<compile_context>
chip_gen: v5e
topology: v5e:2x2
jax: 0.10.0
libtpu: 0.0.40
codegen_flags: <defaults>
</compile_context>

<pallas_src>
import jax
import jax.numpy as jnp
from jax import lax
from jax.experimental import pallas as pl
from jax.experimental.pallas import tpu as pltpu


# ------------------------------- kernels ----------------------------------- #

def _encode_decode(x, we, be):
    # Encoder: contract x[:, n] with we[:, n] -> [TB, L]; no transposed copy of
    # the weight is materialized (dot_general performs the "B transposed"
    # contraction on the MXU).  The resident [L, N] weight feeds both matmuls.
    x = x.astype(we.dtype)
    pre = lax.dot_general(
        x, we,
        dimension_numbers=(((1,), (1,)), ((), ())),
        preferred_element_type=jnp.float32,
    )
    h = jnp.tanh(pre + be)                          # f32 bias add + f32 tanh (EUP)
    # Tied decoder (no bias): recon = h @ W_enc -> [TB, N], f32 accumulation.
    recon = jnp.dot(h.astype(we.dtype), we, preferred_element_type=jnp.float32)
    return h, recon


def _mtae_kernel_clf(x_ref, we_ref, be_ref, wc_ref, bc_ref, recon_ref, logit_ref):
    # x_ref:  [TB, N]  batch tile (input dtype; cast in-VMEM to compute dtype)
    # we_ref: [L,  N]  encoder weight, grid-invariant (resident in VMEM)
    # be_ref: [1,  L]  encoder bias (f32)
    # wc_ref: [1,  L]  classifier weight (f32)
    # bc_ref: [1,  1]  classifier bias (f32)
    h, recon = _encode_decode(x_ref[...], we_ref[...], be_ref[...])
    recon_ref[...] = recon.astype(recon_ref.dtype)
    # Width-1 classifier: VPU multiply + cross-lane reduction beats an MXU pass
    # with a 1-wide result.
    logit = jnp.sum(h * wc_ref[...], axis=-1, keepdims=True) + bc_ref[...]
    logit_ref[...] = logit.astype(logit_ref.dtype)


def _mtae_kernel_noclf(x_ref, we_ref, be_ref, recon_ref):
    _, recon = _encode_decode(x_ref[...], we_ref[...], be_ref[...])
    recon_ref[...] = recon.astype(recon_ref.dtype)


# ------------------------------- wrapper ------------------------------------ #

def _round_up(v, m):
    return (v + m - 1) // m * m


def _vmem_budget_bytes():
    """Per-generation VMEM budget with headroom for Mosaic internal scratch."""
    try:
        cap = int(pltpu.get_tpu_info().vmem_capacity_bytes)
    except Exception:  # conservative fallback (v7x-sized)
        cap = 64 << 20
    # v7x: 64 MiB physical -> ~48 MiB usable; v5e/v6e: 128 MiB -> cap at 100 MiB.
    return max(min(cap - (16 << 20), 100 << 20), 16 << 20)


def _choose_tile_b(batch, row_align, rows_cap, max_tile_b):
    """Batch tile: as large as fits; never split small batches into tiny steps."""
    cap = max(min(rows_cap, max_tile_b), row_align)
    b = _round_up(max(batch, 1), row_align)
    if b > cap:
        return cap
    if b >= 256:
        # >= 2 grid steps, each >= 128 rows: lets the "parallel" axis shard
        # across v7x's two TensorCores while still feeding the MXU full-height
        # tiles.  On single-TC v5e/v6e the extra grid step is ~0.35 us (noise).
        return min(_round_up(pl.cdiv(b, 2), row_align), cap)
    return b


def mt_autoencoder_forward(x, w_enc, b_enc, w_cls=None, b_cls=None, *,
                           eval_classifier=False,
                           compute_dtype=jnp.float32,
                           out_dtype=None,
                           max_tile_b=512):
    """Pallas forward pass of MTAutoEncoder (tied=True, use_dropout=False).

    compute_dtype: MXU dtype for the two matmuls (bf16 is the fast path on all
        of v5e/v6e/v7x; accumulation, bias add and tanh stay in f32).
    out_dtype: dtype of the recon output stream (default f32 to match the
        PyTorch reference; bf16 halves the largest HBM write).
    """
    B, N = x.shape
    L = w_enc.shape[0]

    cdt = jnp.dtype(compute_dtype)
    odt = jnp.dtype(out_dtype) if out_dtype is not None else jnp.dtype(jnp.float32)

    # Lightweight per-call param prep: no padding, just dtype/shape plumbing.
    wep = w_enc.astype(cdt)                            # [L, N]
    bep = b_enc.reshape(1, L).astype(jnp.float32)      # [1, L]

    # bf16 packs 2 rows per sublane -> 16-row alignment keeps tiles dense.
    row_align = 16 if cdt.itemsize < 4 else 8

    # VMEM plan: double-buffered x and recon tiles, conservatively
    # double-buffered resident weight, f32 intermediates (pre / h), slack.
    budget = _vmem_budget_bytes()
    weight_bytes = 2 * L * N * cdt.itemsize
    slack = 2 << 20
    per_row = 2 * N * (x.dtype.itemsize + odt.itemsize) + 4 * L * 4
    rows_cap = (budget - weight_bytes - slack) // per_row
    rows_cap = (rows_cap // row_align) * row_align
    if rows_cap < row_align:
        # TODO(synk): contraction-dim (K-split) fallback for weights that do
        # not fit the VMEM budget; out of scope for this model's sizes.
        raise NotImplementedError(
            "encoder weight too large for the resident-weight kernel "
            f"({weight_bytes >> 20} MiB double-buffered vs {budget >> 20} MiB budget)")
    tile_b = _choose_tile_b(B, row_align, rows_cap, max_tile_b)

    grid = (pl.cdiv(B, tile_b),)

    needed = (2 * tile_b * N * (x.dtype.itemsize + odt.itemsize)
              + weight_bytes + 4 * tile_b * L * 4 + slack)
    vmem_limit = int(min(max(needed, 16 << 20), budget))

    cparams = pltpu.CompilerParams(
        dimension_semantics=("parallel",),
        vmem_limit_bytes=vmem_limit,
    )

    # Block last dims equal the full array dims -> legal without 128-alignment,
    # and no padded HBM traffic.  Rows of x / recon are tiled by tile_b.
    x_spec = pl.BlockSpec((tile_b, N), lambda i: (i, 0))
    we_spec = pl.BlockSpec((L, N), lambda i: (0, 0))        # grid-invariant
    be_spec = pl.BlockSpec((1, L), lambda i: (0, 0))
    recon_spec = pl.BlockSpec((tile_b, N), lambda i: (i, 0))

    if eval_classifier:
        wcp = w_cls.reshape(1, L).astype(jnp.float32)
        bcp = b_cls.reshape(1, 1).astype(jnp.float32)
        recon, logit = pl.pallas_call(
            _mtae_kernel_clf,
            out_shape=(
                jax.ShapeDtypeStruct((B, N), odt),
                jax.ShapeDtypeStruct((B, 1), jnp.float32),
            ),
            grid_spec=pltpu.PrefetchScalarGridSpec(
                num_scalar_prefetch=0,
                grid=grid,
                in_specs=[
                    x_spec, we_spec, be_spec,
                    pl.BlockSpec((1, L), lambda i: (0, 0)),
                    pl.BlockSpec((1, 1), lambda i: (0, 0)),
                ],
                out_specs=[
                    recon_spec,
                    pl.BlockSpec((tile_b, 1), lambda i: (i, 0)),
                ],
            ),
            compiler_params=cparams,
        )(x, wep, bep, wcp, bcp)
        return recon, logit

    recon = pl.pallas_call(
        _mtae_kernel_noclf,
        out_shape=jax.ShapeDtypeStruct((B, N), odt),
        grid_spec=pltpu.PrefetchScalarGridSpec(
            num_scalar_prefetch=0,
            grid=grid,
            in_specs=[x_spec, we_spec, be_spec],
            out_specs=recon_spec,
        ),
        compiler_params=cparams,
    )(x, wep, bep)
    return recon, None


# --------------------------- reference / test -------------------------------- #

def reference_forward(x, w_enc, b_enc, w_cls, b_cls):
    h = jnp.tanh(x @ w_enc.T + b_enc)
    logit = h @ w_cls.T + b_cls.reshape(1, 1)
    recon = h @ w_enc
    return recon, logit


if __name__ == "__main__":
    # Small, deliberately non-128-aligned shapes consistent with the module
    # (num_inputs=990 -> 250, num_latent=200 -> 60); nothing is padded.
    B, NUM_INPUTS, NUM_LATENT = 16, 250, 60

    key = jax.random.PRNGKey(0)
    kx, kwe, kbe, kwc, kbc = jax.random.split(key, 5)

    enc_bound = 1.0 / jnp.sqrt(NUM_INPUTS)
    cls_bound = 1.0 / jnp.sqrt(NUM_LATENT)
    x = jax.random.normal(kx, (B, NUM_INPUTS), dtype=jnp.float32)
    w_enc = jax.random.uniform(kwe, (NUM_LATENT, NUM_INPUTS), jnp.float32,
                               -enc_bound, enc_bound)
    b_enc = jax.random.uniform(kbe, (NUM_LATENT,), jnp.float32,
                               -enc_bound, enc_bound)
    w_cls = jax.random.uniform(kwc, (1, NUM_LATENT), jnp.float32,
                               -cls_bound, cls_bound)
    b_cls = jax.random.uniform(kbc, (1,), jnp.float32, -cls_bound, cls_bound)

    recon_ref, logit_ref = reference_forward(x, w_enc, b_enc, w_cls, b_cls)

    # f32 path, classifier on.
    recon, logit = mt_autoencoder_forward(
        x, w_enc, b_enc, w_cls, b_cls, eval_classifier=True)
    jax.block_until_ready(recon)
    jax.block_until_ready(logit)
    assert recon.shape == (B, NUM_INPUTS)
    assert logit.shape == (B, 1)
    assert jnp.allclose(recon, recon_ref, atol=1e-4, rtol=1e-4)
    assert jnp.allclose(logit, logit_ref, atol=1e-4, rtol=1e-4)

    # eval_classifier=False path: returns (recon, None), no classifier work.
    recon2, logit2 = mt_autoencoder_forward(
        x, w_enc, b_enc, w_cls, b_cls, eval_classifier=False)
    jax.block_until_ready(recon2)
    assert logit2 is None
    assert jnp.allclose(recon2, recon_ref, atol=1e-4, rtol=1e-4)

    # bf16 compute path (fast MXU path on v5e/v6e/v7x), f32 accumulation,
    # bf16 recon output stream -> looser tolerance.
    recon3, logit3 = mt_autoencoder_forward(
        x, w_enc, b_enc, w_cls, b_cls, eval_classifier=True,
        compute_dtype=jnp.bfloat16, out_dtype=jnp.bfloat16)
    jax.block_until_ready(recon3)
    jax.block_until_ready(logit3)
    assert jnp.allclose(recon3.astype(jnp.float32), recon_ref, atol=5e-2, rtol=5e-2)
    assert jnp.allclose(logit3, logit_ref, atol=5e-2, rtol=5e-2)

    print("KERNEL_OK")
</pallas_src>

<mosaic_0001>
module attributes {stable_mosaic.version = 11 : i64} {
  func.func @_mtae_kernel_clf(%arg0: i32, %arg1: memref<16x250xf32, #tpu.memory_space<vmem>>, %arg2: memref<60x250xf32, #tpu.memory_space<vmem>>, %arg3: memref<1x60xf32, #tpu.memory_space<vmem>>, %arg4: memref<1x60xf32, #tpu.memory_space<vmem>>, %arg5: memref<1x1xf32, #tpu.memory_space<vmem>>, %arg6: memref<16x250xf32, #tpu.memory_space<vmem>>, %arg7: memref<16x1xf32, #tpu.memory_space<vmem>>) attributes {dimension_semantics = [#tpu.dimension_semantics<parallel>], iteration_bounds = array<i64: 1>, scalar_prefetch = 0 : i64, scratch_operands = 0 : i64, tpu.core_type = #tpu.core_type<tc>, window_params = [{transform_indices = @transform_0, window_bounds = array<i64: 16, 250>}, {pipeline_mode = #tpu.pipeline_mode<synchronous>, transform_indices = @transform_1, window_bounds = array<i64: 60, 250>}, {pipeline_mode = #tpu.pipeline_mode<synchronous>, transform_indices = @transform_2, window_bounds = array<i64: 1, 60>}, {pipeline_mode = #tpu.pipeline_mode<synchronous>, transform_indices = @transform_3, window_bounds = array<i64: 1, 60>}, {pipeline_mode = #tpu.pipeline_mode<synchronous>, transform_indices = @transform_4, window_bounds = array<i64: 1, 1>}, {transform_indices = @transform_5, window_bounds = array<i64: 16, 250>}, {transform_indices = @transform_6, window_bounds = array<i64: 16, 1>}]} {
    %c0 = arith.constant 0 : index
    %c0_0 = arith.constant 0 : index
    %0 = vector.load %arg1[%c0, %c0_0] : memref<16x250xf32, #tpu.memory_space<vmem>>, vector<16x250xf32>
    %c0_1 = arith.constant 0 : index
    %c0_2 = arith.constant 0 : index
    %1 = vector.load %arg2[%c0_1, %c0_2] : memref<60x250xf32, #tpu.memory_space<vmem>>, vector<60x250xf32>
    %c0_3 = arith.constant 0 : index
    %c0_4 = arith.constant 0 : index
    %2 = vector.load %arg3[%c0_3, %c0_4] : memref<1x60xf32, #tpu.memory_space<vmem>>, vector<1x60xf32>
    %cst = arith.constant dense<0.000000e+00> : vector<16x60xf32>
    %3 = tpu.matmul %0, %1, %cst {dimension_numbers = #tpu.dot_dimension_numbers<[1], [1], [0], [0], [0, 0, 1, 0], [], []>} : vector<16x250xf32>, vector<60x250xf32>, vector<16x60xf32> -> vector<16x60xf32>
    %4 = vector.broadcast %2 : vector<1x60xf32> to vector<16x60xf32>
    %5 = arith.addf %3, %4 : vector<16x60xf32>
    %6 = math.tanh %5 : vector<16x60xf32>
    %cst_5 = arith.constant dense<0.000000e+00> : vector<16x250xf32>
    %7 = tpu.matmul %6, %1, %cst_5 {dimension_numbers = #tpu.dot_dimension_numbers<[1], [0], [0], [1], [0, 0, 1, 1], [], []>} : vector<16x60xf32>, vector<60x250xf32>, vector<16x250xf32> -> vector<16x250xf32>
    %c0_6 = arith.constant 0 : index
    %c0_7 = arith.constant 0 : index
    %8 = vector.load %arg6[%c0_6, %c0_7] : memref<16x250xf32, #tpu.memory_space<vmem>>, vector<16x250xf32>
    tpu.vector_store %arg6[%c0_6, %c0_7], %7 {strides = array<i32>} : memref<16x250xf32, #tpu.memory_space<vmem>>, vector<16x250xf32>,
    %c0_8 = arith.constant 0 : index
    %c0_9 = arith.constant 0 : index
    %9 = vector.load %arg4[%c0_8, %c0_9] : memref<1x60xf32, #tpu.memory_space<vmem>>, vector<1x60xf32>
    %10 = vector.broadcast %9 : vector<1x60xf32> to vector<16x60xf32>
    %11 = arith.mulf %6, %10 : vector<16x60xf32>
    %cst_10 = arith.constant dense<0.000000e+00> : vector<16xf32>
    %12 = vector.multi_reduction <add>, %11, %cst_10 [1] : vector<16x60xf32> to vector<16xf32>
    %13 = vector.shape_cast %12 : vector<16xf32> to vector<16x1xf32>
    %c0_11 = arith.constant 0 : index
    %c0_12 = arith.constant 0 : index
    %14 = vector.load %arg5[%c0_11, %c0_12] : memref<1x1xf32, #tpu.memory_space<vmem>>, vector<1x1xf32>
    %15 = vector.broadcast %14 : vector<1x1xf32> to vector<16x1xf32>
    %16 = arith.addf %13, %15 : vector<16x1xf32>
    %c0_13 = arith.constant 0 : index
    %c0_14 = arith.constant 0 : index
    %17 = vector.load %arg7[%c0_13, %c0_14] : memref<16x1xf32, #tpu.memory_space<vmem>>, vector<16x1xf32>
    tpu.vector_store %arg7[%c0_13, %c0_14], %16 {strides = array<i32>} : memref<16x1xf32, #tpu.memory_space<vmem>>, vector<16x1xf32>,
    return
  }
  func.func @transform_0(%arg0: i32) -> (i32, i32) {
    %c0_i32 = arith.constant 0 : i32
    %c0_i32_0 = arith.constant 0 : i32
    return %arg0, %c0_i32 : i32, i32
  }
  func.func @transform_1(%arg0: i32) -> (i32, i32) {
    %c0_i32 = arith.constant 0 : i32
    %c0_i32_0 = arith.constant 0 : i32
    %c0_i32_1 = arith.constant 0 : i32
    return %c0_i32, %c0_i32_0 : i32, i32
  }
  func.func @transform_2(%arg0: i32) -> (i32, i32) {
    %c0_i32 = arith.constant 0 : i32
    %c0_i32_0 = arith.constant 0 : i32
    %c0_i32_1 = arith.constant 0 : i32
    return %c0_i32, %c0_i32_0 : i32, i32
  }
  func.func @transform_3(%arg0: i32) -> (i32, i32) {
    %c0_i32 = arith.constant 0 : i32
    %c0_i32_0 = arith.constant 0 : i32
    %c0_i32_1 = arith.constant 0 : i32
    return %c0_i32, %c0_i32_0 : i32, i32
  }
  func.func @transform_4(%arg0: i32) -> (i32, i32) {
    %c0_i32 = arith.constant 0 : i32
    %c0_i32_0 = arith.constant 0 : i32
    %c0_i32_1 = arith.constant 0 : i32
    return %c0_i32, %c0_i32_0 : i32, i32
  }
  func.func @transform_5(%arg0: i32) -> (i32, i32) {
    %c0_i32 = arith.constant 0 : i32
    %c0_i32_0 = arith.constant 0 : i32
    return %arg0, %c0_i32 : i32, i32
  }
  func.func @transform_6(%arg0: i32) -> (i32, i32) {
    %c0_i32 = arith.constant 0 : i32
    %c0_i32_0 = arith.constant 0 : i32
    return %arg0, %c0_i32 : i32, i32
  }
}

</mosaic_0001>

<llo_original>
// kernel: tpu_custom_call.1
$region0: #{tpu_custom_call.1}
  #allocation0 [shape = 'u32[]', space=smem, size = 0x4, offset = 0x4, fixed_abs, tag = 'smem constant byte address 0x4 - core index']
  #allocation1 [shape = 'u32[72,128]{1,0:T(1,128)}', space=vmem, size = 0x9000, scoped, tag = 'internal scratch']
  #allocation2 [shape = 'f32[1,1]{1,0:T(1,128)S(1)}', space=vmem, size = 0x200, scoped, tag = 'scoped memory for tpu_custom_call.1']
  %s0 = inlined_call_operand.hbm [shape: f32[16,250], index: 0, kind: input, shape index: {}]
  %s1 = inlined_call_operand.hbm [shape: f32[60,250], index: 1, kind: input, shape index: {}]
  %s2 = inlined_call_operand.vmem [shape: f32[1,60], index: 2, kind: input, shape index: {}]
  %s3 = inlined_call_operand.vmem [shape: f32[1,60], index: 3, kind: input, shape index: {}]
  %s4 = inlined_call_operand.<no memory space> [shape: f32[1,1], index: 4, kind: input, shape index: {}]
  %s5 = inlined_call_operand.hbm [shape: f32[16,250], index: 5, kind: output, shape index: {0}]
  %s6 = inlined_call_operand.vmem [shape: f32[16,1], index: 6, kind: output, shape index: {1}]
  %7 = xla_tuple %s5, %s6
  %s8 = sld [smem:[#allocation0]]
  $region46: #{tpu_custom_call.1} parent=0
    _
  %s10 = ssub.s32 1, %s8
  %s11 = scalar_select 0, %s10, %s8
  %v12 = vstv %s4
  %13 = vst [vmem:[#allocation2] sm:$0x1] %v12
  $region1: #{tpu_custom_call.1} parent=0
    #allocation3 [shape = 'u8[16384]{0}', space=vmem, size = 0x4000, scoped, tag = 'input window, operand 0, single buffered']
    #allocation4 [shape = 's32[1]{0}', space=sflag, size = 0x4, scoped, tag = 'scoped memory for tpu_custom_call.1']
    #allocation5 [shape = 's32[1]{0}', space=sflag, size = 0x4, scoped, tag = 'scoped memory for tpu_custom_call.1']
    #allocation6 [shape = 'u8[65536]{0}', space=vmem, size = 0x10000, scoped, tag = 'input window, operand 1, single buffered']
    #allocation7 [shape = 's32[1]{0}', space=sflag, size = 0x4, scoped, tag = 'scoped memory for tpu_custom_call.1']
    #allocation8 [shape = 'u8[16384]{0}', space=vmem, size = 0x4000, scoped, tag = 'output window, operand 0, single buffered']
    %14 = vsyncpa [#allocation4], 0
    %15 = vsyncpa [#allocation7], 0
    %16 = vsyncpa [#allocation5], 0
    // Predicated region
    $region2: #{tpu_custom_call.1} parent=1 // pred_check
      _
    $region3: #{tpu_custom_call.1} parent=1 // pred_check_branch
      %18 = sbr.rel (0) target = $region5
    $region4: #{tpu_custom_call.1} parent=1 // pred_region
      %20 = vsyncadd [#allocation4], 0
      %s21 = sshll.u32 %s0, 4
      %s22 = int_to_ptr.hbm [resolvable:$true] %s21
      %s23 = sshll.u32 [#allocation3], 4
      %s24 = int_to_ptr.vmem [resolvable:$true] %s23
      %29 = dma.hbm_to_vmem [thread:$0]  %s22, 512, %s24, [#allocation4], 256, 256, 16
    $region5: #{tpu_custom_call.1} parent=1 // pred_fallthru
      _
    // Predicated region
    $region6: #{tpu_custom_call.1} parent=1 // pred_check
      _
    $region7: #{tpu_custom_call.1} parent=1 // pred_check_branch
      %31 = sbr.rel (0) target = $region9
    $region8: #{tpu_custom_call.1} parent=1 // pred_region
      %33 = vsyncadd [#allocation7], 0
      %s34 = sshll.u32 %s1, 4
      %s35 = int_to_ptr.hbm [resolvable:$true] %s34
      %s36 = sshll.u32 [#allocation6], 4
      %s37 = int_to_ptr.vmem [resolvable:$true] %s36
      %42 = dma.hbm_to_vmem [thread:$0]  %s35, 2048, %s37, [#allocation7], 256, 256, 16
    $region9: #{tpu_custom_call.1} parent=1 // pred_fallthru
      _
    // Predicated region
    $region10: #{tpu_custom_call.1} parent=1 // pred_check
      _
    $region11: #{tpu_custom_call.1} parent=1 // pred_check_branch
      %44 = sbr.rel (0) target = $region13
    $region12: #{tpu_custom_call.1} parent=1 // pred_region
      _
    $region13: #{tpu_custom_call.1} parent=1 // pred_fallthru
      _
    // Predicated region
    $region14: #{tpu_custom_call.1} parent=1 // pred_check
      _
    $region15: #{tpu_custom_call.1} parent=1 // pred_check_branch
      %46 = sbr.rel (0) target = $region17
    $region16: #{tpu_custom_call.1} parent=1 // pred_region
      _
    $region17: #{tpu_custom_call.1} parent=1 // pred_fallthru
      _
    // Predicated region
    $region18: #{tpu_custom_call.1} parent=1 // pred_check
      _
    $region19: #{tpu_custom_call.1} parent=1 // pred_check_branch
      %48 = sbr.rel (0) target = $region21
    $region20: #{tpu_custom_call.1} parent=1 // pred_region
      _
    $region21: #{tpu_custom_call.1} parent=1 // pred_fallthru
      _
    // Predicated region
    $region22: #{tpu_custom_call.1} parent=1 // pred_check
      _
    $region23: #{tpu_custom_call.1} parent=1 // pred_check_branch
      %50 = sbr.rel (0) target = $region25
    $region24: #{tpu_custom_call.1} parent=1 // pred_region
      %52 = dma.done [#allocation4], 512
    $region25: #{tpu_custom_call.1} parent=1 // pred_fallthru
      _
    // Predicated region
    $region26: #{tpu_custom_call.1} parent=1 // pred_check
      _
    $region27: #{tpu_custom_call.1} parent=1 // pred_check_branch
      %54 = sbr.rel (0) target = $region29
    $region28: #{tpu_custom_call.1} parent=1 // pred_region
      %56 = dma.done [#allocation7], 2048
    $region29: #{tpu_custom_call.1} parent=1 // pred_fallthru
      _
    %v57 = vld [vmem:[#allocation3] sm:$0xff]
    %v58 = vld [vmem:[#allocation3 + $0x8] sm:$0xff]
    %v59 = vld [vmem:[#allocation3 + $0x10] sm:$0xff]
    %v60 = vld [vmem:[#allocation3 + $0x18] sm:$0xff]
    %v61 = vld [vmem:[#allocation6] sm:$0xff]
    %v62 = vld [vmem:[#allocation6 + $0x8] sm:$0xff]
    %v63 = vld [vmem:[#allocation6 + $0x10] sm:$0xff]
    %v64 = vld [vmem:[#allocation6 + $0x18] sm:$0xff]
    %v65 = vld [vmem:[#allocation6 + $0x20] sm:$0xff]
    %v66 = vld [vmem:[#allocation6 + $0x28] sm:$0xff]
    %v67 = vld [vmem:[#allocation6 + $0x30] sm:$0xff]
    %v68 = vld [vmem:[#allocation6 + $0x38] sm:$0xff]
    %v69 = vld [vmem:[#allocation6 + $0x40] sm:$0xff]
    %v70 = vld [vmem:[#allocation6 + $0x48] sm:$0xff]
    %v71 = vld [vmem:[#allocation6 + $0x50] sm:$0xff]
    %v72 = vld [vmem:[#allocation6 + $0x58] sm:$0xff]
    %v73 = vld [vmem:[#allocation6 + $0x60] sm:$0xff]
    %v74 = vld [vmem:[#allocation6 + $0x68] sm:$0xff]
    %v75 = vld [vmem:[#allocation6 + $0x70] sm:$0xf]
    %v76 = vld [vmem:[#allocation6 + $0x78] sm:$0xf]
    %v77 = vld [vmem:[%s2] sm:$0x1]
    %v79 = vperm.slane %v77, 0
    %vm81 = vcmask 998400
    %v83 = vsel %vm81, %v58, 0
    %v86 = vsel %vm81, %v60, 0
    %v89 = vsel %vm81, %v62, 0
    %v92 = vsel %vm81, %v64, 0
    %v95 = vsel %vm81, %v66, 0
    %v98 = vsel %vm81, %v68, 0
    %v101 = vsel %vm81, %v70, 0
    %v104 = vsel %vm81, %v72, 0
    %v107 = vsel %vm81, %v74, 0
    %v110 = vsel %vm81, %v76, 0
    %112 = vmatpush.xpose.msra.mxu0 0.0
    %113 = vmatpush.xpose.msra.mxu0 0.0
    %114 = vmatpush.xpose.msra.mxu0 0.0
    %115 = vmatpush.xpose.msra.mxu0 0.0
    %116 = vmatpush.xpose.msra.mxu0 0.0
    %117 = vmatpush.xpose.msra.mxu0 0.0
    %118 = vmatpush.xpose.msra.mxu0 0.0
    %119 = vmatpush.xpose.msra.mxu0 0.0
    %120 = vmatpush.xpose.msra.mxu0 %v75
    %121 = vmatpush.xpose.msra.mxu0 %v73
    %122 = vmatpush.xpose.msra.mxu0 %v71
    %123 = vmatpush.xpose.msra.mxu0 %v69
    %124 = vmatpush.xpose.msra.mxu0 %v67
    %125 = vmatpush.xpose.msra.mxu0 %v65
    %126 = vmatpush.xpose.msra.mxu0 %v63
    %127 = vmatpush.xpose.msra.mxu0 %v61
    %128 = vmatmul.f32.gmra.mxu0 %v57
    %v129 = vpop.f32.mrf.mxu0
    %v130 = vadd.f32 %v79, %v129
    %131 = vmatmul.f32.gmra.mxu0 %v59
    %v132 = vpop.f32.mrf.mxu0
    %v133 = vadd.f32 %v79, %v132
    %134 = vdwg.mxu0
    %135 = vmatpush.xpose.msra.mxu0 0.0
    %136 = vmatpush.xpose.msra.mxu0 0.0
    %137 = vmatpush.xpose.msra.mxu0 0.0
    %138 = vmatpush.xpose.msra.mxu0 0.0
    %139 = vmatpush.xpose.msra.mxu0 0.0
    %140 = vmatpush.xpose.msra.mxu0 0.0
    %141 = vmatpush.xpose.msra.mxu0 0.0
    %142 = vmatpush.xpose.msra.mxu0 0.0
    %143 = vmatpush.xpose.msra.mxu0 %v110
    %144 = vmatpush.xpose.msra.mxu0 %v107
    %145 = vmatpush.xpose.msra.mxu0 %v104
    %146 = vmatpush.xpose.msra.mxu0 %v101
    %147 = vmatpush.xpose.msra.mxu0 %v98
    %148 = vmatpush.xpose.msra.mxu0 %v95
    %149 = vmatpush.xpose.msra.mxu0 %v92
    %150 = vmatpush.xpose.msra.mxu0 %v89
    %151 = vmatmul.f32.gmra.mxu0 %v83
    %v152 = vpop.f32.mrf.mxu0
    %v153 = vadd.f32 %v130, %v152
    %154 = vmatmul.f32.gmra.mxu0 %v86
    %v155 = vpop.f32.mrf.mxu0
    %v156 = vadd.f32 %v133, %v155
    %157 = vdwg.mxu0
    %v158 = vtanh.pop %v153
    %v159 = vtanh.pop %v156
    %vm160 = vcmask 490496
    %v162 = vsel %vm160, %v158, 0
    %v165 = vsel %vm160, %v159, 0
    %vm167 = vcmask 1043456
    %v169 = vsel %vm167, %v75, 0
    %v171 = vsel %vm167, %v76, 0
    %173 = vmatpush.msra.mxu0 0.0
    %174 = vmatpush.msra.mxu0 0.0
    %175 = vmatpush.msra.mxu0 0.0
    %176 = vmatpush.msra.mxu0 0.0
    %177 = vmatpush.msra.mxu0 0.0
    %178 = vmatpush.msra.mxu0 0.0
    %179 = vmatpush.msra.mxu0 0.0
    %180 = vmatpush.msra.mxu0 0.0
    %181 = vmatpush.msra.mxu0 %v169
    %182 = vmatpush.msra.mxu0 %v73
    %183 = vmatpush.msra.mxu0 %v71
    %184 = vmatpush.msra.mxu0 %v69
    %185 = vmatpush.msra.mxu0 %v67
    %186 = vmatpush.msra.mxu0 %v65
    %187 = vmatpush.msra.mxu0 %v63
    %188 = vmatpush.msra.mxu0 %v61
    %189 = vmatmul.f32.gmra.mxu0 %v162
    %v190 = vpop.f32.mrf.mxu0
    %v191 = vadd.f32 0.0, %v190
    %192 = vmatmul.f32.gmra.mxu0 %v165
    %v193 = vpop.f32.mrf.mxu0
    %v194 = vadd.f32 0.0, %v193
    %195 = vdwg.mxu0
    %196 = vmatpush.msra.mxu0 0.0
    %197 = vmatpush.msra.mxu0 0.0
    %198 = vmatpush.msra.mxu0 0.0
    %199 = vmatpush.msra.mxu0 0.0
    %200 = vmatpush.msra.mxu0 0.0
    %201 = vmatpush.msra.mxu0 0.0
    %202 = vmatpush.msra.mxu0 0.0
    %203 = vmatpush.msra.mxu0 0.0
    %204 = vmatpush.msra.mxu0 %v171
    %205 = vmatpush.msra.mxu0 %v74
    %206 = vmatpush.msra.mxu0 %v72
    %207 = vmatpush.msra.mxu0 %v70
    %208 = vmatpush.msra.mxu0 %v68
    %209 = vmatpush.msra.mxu0 %v66
    %210 = vmatpush.msra.mxu0 %v64
    %211 = vmatpush.msra.mxu0 %v62
    %212 = vmatmul.f32.gmra.mxu0 %v162
    %v213 = vpop.f32.mrf.mxu0
    %v214 = vadd.f32 0.0, %v213
    %215 = vmatmul.f32.gmra.mxu0 %v165
    %v216 = vpop.f32.mrf.mxu0
    %v217 = vadd.f32 0.0, %v216
    %218 = vdwg.mxu0
    %219 = vst [vmem:[#allocation8] sm:$0xff] %v191
    %220 = vst.msk [vmem:[#allocation8 + $0x8] sm:$0xff] %vm81, %v214
    %221 = vst [vmem:[#allocation8 + $0x10] sm:$0xff] %v194
    %222 = vst.msk [vmem:[#allocation8 + $0x18] sm:$0xff] %vm81, %v217
    %v223 = vld [vmem:[%s3] sm:$0x1]
    %v225 = vperm.slane %v223, 0
    %v227 = vmul.f32 %v158, %v225
    %v228 = vmul.f32 %v159, %v225
    %v229 = vsel %vm160, %v227, 0.0
    %230 = vadd.xlane.f32.xlu0 %v229
    %v231 = vpop.xlane.xlu0 %230
    %v232 = vsel %vm160, %v228, 0.0
    %233 = vadd.xlane.f32.xlu0 %v232
    %v234 = vpop.xlane.xlu0 %233
    %v235 = vld [vmem:[#allocation2] sm:$0x1]
    %v237 = vperm.slane %v235, 0
    %v239 = vadd.f32 %v231, %v237
    %v240 = vadd.f32 %v234, %v237
    %vm241 = vcmask 7168
    %242 = vst.msk [vmem:[%s6] sm:$0xff] %vm241, %v239
    %243 = vst.msk [vmem:[%s6 + $0x8] sm:$0xff] %vm241, %v240
    // Predicated region
    $region30: #{tpu_custom_call.1} parent=1 // pred_check
      _
    $region31: #{tpu_custom_call.1} parent=1 // pred_check_branch
      %245 = sbr.rel (0) target = $region33
    $region32: #{tpu_custom_call.1} parent=1 // pred_region
      %247 = vsyncadd [#allocation5], 0
      %s248 = sshll.u32 [#allocation8], 4
      %s249 = int_to_ptr.vmem [resolvable:$true] %s248
      %s250 = sshll.u32 %s5, 4
      %s251 = int_to_ptr.hbm [resolvable:$true] %s250
      %256 = dma.vmem_to_hbm [thread:$0]  %s249, 512, %s251, [#allocation5], 256, 256, 16
    $region33: #{tpu_custom_call.1} parent=1 // pred_fallthru
      _
    // Predicated region
    $region34: #{tpu_custom_call.1} parent=1 // pred_check
      _
    $region35: #{tpu_custom_call.1} parent=1 // pred_check_branch
      %258 = sbr.rel (0) target = $region37
    $region36: #{tpu_custom_call.1} parent=1 // pred_region
      _
    $region37: #{tpu_custom_call.1} parent=1 // pred_fallthru
      _
    // Predicated region
    $region38: #{tpu_custom_call.1} parent=1 // pred_check
      _
    $region39: #{tpu_custom_call.1} parent=1 // pred_check_branch
      %260 = sbr.rel (0) target = $region41
    $region40: #{tpu_custom_call.1} parent=1 // pred_region
      %262 = dma.done [#allocation5], 512
    $region41: #{tpu_custom_call.1} parent=1 // pred_fallthru
      _
    // Predicated region
    $region42: #{tpu_custom_call.1} parent=1 // pred_check
      _
    $region43: #{tpu_custom_call.1} parent=1 // pred_check_branch
      %264 = sbr.rel (0) target = $region45
    $region44: #{tpu_custom_call.1} parent=1 // pred_region
      _
    $region45: #{tpu_custom_call.1} parent=1 // pred_fallthru
      _
    %265 = vsyncpa [#allocation4], 1
    %266 = vsyncpa [#allocation7], 1
    %267 = vsyncpa [#allocation5], 1

</llo_original>
